<compile_context>
chip_gen: v7x
topology: tpu7x:2x2x1
jax: 0.10.0
libtpu: 0.0.40
codegen_flags: <defaults>
</compile_context>

<pallas_src>
import functools

import jax
import jax.numpy as jnp
from jax.experimental import pallas as pl
from jax.experimental.pallas import tpu as pltpu


# ---------------------------------------------------------------------------
# Hardware probes (cached; conservative fallbacks so they never break compile)
# ---------------------------------------------------------------------------

@functools.lru_cache(maxsize=None)
def _vmem_capacity_bytes():
    """Physical VMEM of the local chip; conservative default if unknown."""
    try:
        info = pltpu.get_tpu_info()
        v = int(getattr(info, "vmem_capacity_bytes", 0))
        if v > 0:
            return v
    except Exception:
        pass
    return 64 << 20  # smallest physical VMEM across v5e / v6e / v7x


@functools.lru_cache(maxsize=None)
def _batch_axis_semantics():
    """CORE_PARALLEL (guarantees the 2-TensorCore split on multi-core chips)
    if the current chip/toolchain accepts it, else plain PARALLEL."""
    def _probe_kernel(x_ref, o_ref):
        o_ref[...] = x_ref[...]

    try:
        probe = pl.pallas_call(
            _probe_kernel,
            out_shape=jax.ShapeDtypeStruct((16, 128), jnp.float32),
            grid=(2,),
            in_specs=[pl.BlockSpec((8, 128), lambda i: (i, 0))],
            out_specs=pl.BlockSpec((8, 128), lambda i: (i, 0)),
            compiler_params=pltpu.CompilerParams(
                dimension_semantics=(pltpu.CORE_PARALLEL,)),
        )
        jax.jit(probe).lower(
            jax.ShapeDtypeStruct((16, 128), jnp.float32)).compile()
        return pltpu.CORE_PARALLEL
    except Exception:
        return pltpu.PARALLEL


# ---------------------------------------------------------------------------
# Kernel + tiling plan
# ---------------------------------------------------------------------------

def _broadcast_kernel(enc_ref, out_ref):
    # enc_ref: (1, tnd) chunk of the flattened table (same block for every
    # batch step); out_ref: (tb, tnd) tile -> sublane broadcast of one row.
    out_ref[...] = jnp.broadcast_to(enc_ref[...], out_ref.shape)


def _block_plan(nd, itemsize, batch_size):
    """Static (Python-int) tile plan derived from the chip's VMEM."""
    vmem = _vmem_capacity_bytes()
    # Raise the scoped VMEM limit above the 16/32 MiB defaults, but keep
    # ample headroom below physical capacity (v7x only has 64 MiB).
    vmem_limit = int(min(96 << 20, max(32 << 20, vmem * 3 // 4)))
    # Per-output-block budget: the pipeline double-buffers the output block
    # and keeps (double-buffered) input chunks of at most budget/8 resident,
    # so 2*B + 2*(B/8) stays well inside vmem_limit.
    out_block_budget = int(
        min(24 << 20, max(2 << 20, (vmem_limit - (4 << 20)) * 2 // 5)))

    row_bytes = nd * itemsize
    max_row_chunk_bytes = max(256 << 10, out_block_budget // 8)
    if row_bytes <= max_row_chunk_bytes:
        tnd = nd                                 # full row (== array dim)
    else:
        # 128-lane-aligned chunk so both in/out blocks stay lane-dense.
        tnd = max(128, ((max_row_chunk_bytes // itemsize) // 128) * 128)

    chunk_bytes = tnd * itemsize
    tb = max(1, out_block_budget // chunk_bytes)
    if tb >= batch_size:
        tb = batch_size                          # single (full) batch block
    else:
        tb = max(8, (tb // 8) * 8)               # sublane-aligned blocks
    return tb, tnd, vmem_limit


def _broadcast_over_batch(encodings, batch_size):
    """(N, D) table -> materialized (batch_size, N, D) via a Pallas copy."""
    n, d = encodings.shape
    nd = n * d
    itemsize = jnp.dtype(encodings.dtype).itemsize
    tb, tnd, vmem_limit = _block_plan(nd, itemsize, batch_size)

    enc_flat = encodings.reshape(1, nd)          # lane-dense presentation
    grid = (pl.cdiv(batch_size, tb), pl.cdiv(nd, tnd))

    out_flat = pl.pallas_call(
        _broadcast_kernel,
        out_shape=jax.ShapeDtypeStruct((batch_size, nd), encodings.dtype),
        grid_spec=pltpu.PrefetchScalarGridSpec(
            num_scalar_prefetch=0,
            grid=grid,
            in_specs=[
                # flattened-table chunk; constant across the batch axis
                pl.BlockSpec((1, tnd), lambda b, c: (0, c)),
            ],
            out_specs=pl.BlockSpec((tb, tnd), lambda b, c: (b, c)),
        ),
        compiler_params=pltpu.CompilerParams(
            # batch axis: CORE_PARALLEL where supported (v7x 2-TC split),
            # lane-chunk axis: arbitrary (sequential; usually size 1).
            dimension_semantics=(_batch_axis_semantics(), pltpu.ARBITRARY),
            vmem_limit_bytes=vmem_limit,
        ),
        cost_estimate=pl.CostEstimate(
            flops=0,
            transcendentals=0,
            bytes_accessed=(batch_size + 1) * nd * itemsize,
        ),
    )(enc_flat)

    return out_flat.reshape(batch_size, n, d)


# Below this output size a pallas_call launch (+ pipeline prologue) costs more
# than XLA's fused broadcast (often a zero-copy view for downstream consumers).
_PALLAS_MIN_OUT_BYTES = 2 << 20


# ---------------------------------------------------------------------------
# Module
# ---------------------------------------------------------------------------

class LearnedPositionalEncoding:
    """JAX/Pallas equivalent of the PyTorch LearnedPositionalEncoding."""

    def __init__(self, num_internal_sites, dim, key=None, dtype=jnp.float32):
        self.num_internal_sites = num_internal_sites
        self.dim = dim
        if key is None:
            key = jax.random.PRNGKey(0)
        # torch.randn -> standard normal init (deterministic via PRNGKey here)
        self.encodings = jax.random.normal(
            key, (num_internal_sites, dim), dtype=dtype)

    def forward(self, batch_size, site=None, out_dtype=None):
        """Returns (batch, num_internal_sites, dim) if site is None,
        else (batch, 1, dim). `site` must be a static Python int."""
        enc = self.encodings
        if out_dtype is not None and out_dtype != enc.dtype:
            # Optional down-cast (e.g. bf16) before materializing: halves the
            # HBM write traffic of this write-bound broadcast.
            enc = enc.astype(out_dtype)

        if site is None:
            out_bytes = (batch_size * self.num_internal_sites * self.dim
                         * jnp.dtype(enc.dtype).itemsize)
            if out_bytes < _PALLAS_MIN_OUT_BYTES:
                # Small-problem fast path: a kernel launch is pure overhead.
                return jnp.broadcast_to(
                    enc[None, :, :],
                    (batch_size, self.num_internal_sites, self.dim))
            return _broadcast_over_batch(enc, batch_size)

        # Single-site path: one (1, D) row; keep it as a free/fusable
        # broadcast instead of launching a kernel for ~D*4 bytes per row.
        return jnp.broadcast_to(
            enc[site][None, None, :], (batch_size, 1, self.dim))

    __call__ = forward


# ---------------------------------------------------------------------------
# Self-test
# ---------------------------------------------------------------------------

if __name__ == "__main__":
    key = jax.random.PRNGKey(0)

    num_sites = 8
    num_internal_sites = num_sites + 1    # 9
    dim = 32
    batch_size = 2

    module = LearnedPositionalEncoding(num_internal_sites, dim, key=key)

    # --- Pallas kernel path (called directly: the forward() small-problem
    # --- fast path would skip the kernel for such a tiny table). ------------
    out_pallas = jax.block_until_ready(
        _broadcast_over_batch(module.encodings, batch_size))
    assert out_pallas.shape == (batch_size, num_internal_sites, dim)

    out_pallas_big = jax.block_until_ready(
        _broadcast_over_batch(module.encodings, 16))
    assert out_pallas_big.shape == (16, num_internal_sites, dim)

    # --- Module-level forward (fast path + single-site path) ----------------
    out_all = jax.block_until_ready(module(batch_size, site=None))
    out_site = jax.block_until_ready(module(batch_size, site=3))
    assert out_all.shape == (batch_size, num_internal_sites, dim)
    assert out_site.shape == (batch_size, 1, dim)

    # --- Correctness vs plain-JAX broadcast reference ------------------------
    ref_small = jnp.broadcast_to(module.encodings[None, :, :],
                                 (batch_size, num_internal_sites, dim))
    ref_big = jnp.broadcast_to(module.encodings[None, :, :],
                               (16, num_internal_sites, dim))
    ref_site = jnp.broadcast_to(module.encodings[None, 3:4, :],
                                (batch_size, 1, dim))
    assert jnp.array_equal(out_pallas, ref_small)
    assert jnp.array_equal(out_pallas_big, ref_big)
    assert jnp.array_equal(out_all, ref_small)
    assert jnp.array_equal(out_site, ref_site)

    print("KERNEL_OK")
</pallas_src>

<mosaic_0001>
module attributes {stable_mosaic.version = 11 : i64} {
  func.func @_broadcast_kernel(%arg0: i32, %arg1: i32, %arg2: memref<1x288xf32, #tpu.memory_space<vmem>>, %arg3: memref<2x288xf32, #tpu.memory_space<vmem>>) attributes {dimension_semantics = [#tpu.dimension_semantics<parallel>, #tpu.dimension_semantics<arbitrary>], iteration_bounds = array<i64: 1, 1>, scalar_prefetch = 0 : i64, scratch_operands = 0 : i64, tpu.core_type = #tpu.core_type<tc>, window_params = [{transform_indices = @transform_0, window_bounds = array<i64: 1, 288>}, {transform_indices = @transform_1, window_bounds = array<i64: 2, 288>}]} {
    %c0 = arith.constant 0 : index
    %c0_0 = arith.constant 0 : index
    %0 = vector.load %arg2[%c0, %c0_0] : memref<1x288xf32, #tpu.memory_space<vmem>>, vector<1x288xf32>
    %1 = vector.shape_cast %0 : vector<1x288xf32> to vector<1x288xf32>
    %2 = vector.broadcast %1 : vector<1x288xf32> to vector<2x288xf32>
    %c0_1 = arith.constant 0 : index
    %c0_2 = arith.constant 0 : index
    %3 = vector.load %arg3[%c0_1, %c0_2] : memref<2x288xf32, #tpu.memory_space<vmem>>, vector<2x288xf32>
    tpu.vector_store %arg3[%c0_1, %c0_2], %2 {strides = array<i32>} : memref<2x288xf32, #tpu.memory_space<vmem>>, vector<2x288xf32>,
    return
  }
  func.func @transform_0(%arg0: i32, %arg1: i32) -> (i32, i32) {
    %c0_i32 = arith.constant 0 : i32
    %c0_i32_0 = arith.constant 0 : i32
    return %c0_i32, %arg1 : i32, i32
  }
  func.func @transform_1(%arg0: i32, %arg1: i32) -> (i32, i32) {
    %c0_i32 = arith.constant 0 : i32
    return %arg0, %arg1 : i32, i32
  }
}

</mosaic_0001>

<llo_original>
// kernel: tpu_custom_call.1
$region0: #{tpu_custom_call.1}
  #allocation0 [shape = 'u32[]', space=smem, size = 0x4, offset = 0x4, fixed_abs, tag = 'smem constant byte address 0x4 - core index']
  #allocation1 [shape = 'u32[144,128]{1,0:T(1,128)}', space=vmem, size = 0x12000, scoped, tag = 'internal scratch']
  %s0 = inlined_call_operand.hbm [shape: f32[1,288], index: 0, kind: input, shape index: {}]
  %s1 = inlined_call_operand.hbm [shape: f32[2,288], index: 1, kind: output, shape index: {}]
  %s2 = sld [smem:[#allocation0]]
  $region18: #{tpu_custom_call.1} parent=0
    _
  %s4 = ssub.s32 1, %s2
  %s5 = scalar_select 0, %s4, %s2
  $region1: #{tpu_custom_call.1} parent=0
    #allocation2 [shape = 'u8[1536]{0}', space=vmem, size = 0x800, scoped, tag = 'input window, operand 0, single buffered']
    #allocation3 [shape = 's32[1]{0}', space=sflag, size = 0x4, scoped, tag = 'scoped memory for tpu_custom_call.1']
    #allocation4 [shape = 's32[1]{0}', space=sflag, size = 0x4, scoped, tag = 'scoped memory for tpu_custom_call.1']
    #allocation5 [shape = 'u8[3072]{0}', space=vmem, size = 0xc00, scoped, tag = 'output window, operand 0, single buffered']
    %6 = vsyncpa [#allocation3], 0
    %7 = vsyncpa [#allocation4], 0
    // Predicated region
    $region2: #{tpu_custom_call.1} parent=1 // pred_check
      _
    $region3: #{tpu_custom_call.1} parent=1 // pred_check_branch
      %9 = sbr.rel (0) target = $region5
    $region4: #{tpu_custom_call.1} parent=1 // pred_region
      %s11 = ssub.s32 48, 48
      %12 = vsyncadd [#allocation3], %s11
      %s14 = sshll.u32 [#allocation2], 4
      %s15 = int_to_ptr.vmem [resolvable:$true] %s14
      %17 = dma.hbm_to_vmem [thread:$0]  %s0, 48, %s15, [#allocation3]
    $region5: #{tpu_custom_call.1} parent=1 // pred_fallthru
      _
    // Predicated region
    $region6: #{tpu_custom_call.1} parent=1 // pred_check
      _
    $region7: #{tpu_custom_call.1} parent=1 // pred_check_branch
      %19 = sbr.rel (0) target = $region9
    $region8: #{tpu_custom_call.1} parent=1 // pred_region
      %20 = dma.done [#allocation3], 48
    $region9: #{tpu_custom_call.1} parent=1 // pred_fallthru
      _
    %v21 = vld [vmem:[#allocation2] sm:$0x7]
    %v23 = vlaneseq
    %v24 = vshrl.u32 %v23, 7
    %v25 = vsub.s32 0, %v24
    %v26 = vrot.slane %v21, %v25
    %v27 = vlaneseq
    %v28 = vshrl.u32 %v27, 7
    %v29 = vsub.s32 1, %v28
    %v30 = vrot.slane %v21, %v29
    %v31 = vlaneseq
    %v32 = vshrl.u32 %v31, 7
    %v33 = vsub.s32 2, %v32
    %v34 = vrot.slane %v21, %v33
    %v35 = vcombine.low %v26, %v30
    %v37 = vunpack.c.l.s4 1983009808
    %v38 = vunpack.c.0.s8 %v37
    %v39 = vlaneseq
    %v40 = vshrl.u32 %v39, 7
    %v41 = vsub.s32 %v38, %v40
    %v42 = vrot.slane %v35, %v41
    %v44 = vunpack.c.l.s4 1983009808
    %v45 = vunpack.c.0.s8 %v44
    %v46 = vlaneseq
    %v47 = vshrl.u32 %v46, 7
    %v48 = vsub.s32 %v45, %v47
    %v49 = vrot.slane %v34, %v48
    %v50 = vcombine.low %v42, %v49
    %vm52 = vcmask 1041408
    %vm53 = vcmask 1043458
    %vm54 = vmor %vm53, %vm52
    %vm55 = vcmask 259076
    %vm56 = vmor %vm55, %vm54
    %57 = vst.msk [vmem:[#allocation5] sm:$0x3f] %vm56, %v50
    // Predicated region
    $region10: #{tpu_custom_call.1} parent=1 // pred_check
      _
    $region11: #{tpu_custom_call.1} parent=1 // pred_check_branch
      %59 = sbr.rel (0) target = $region13
    $region12: #{tpu_custom_call.1} parent=1 // pred_region
      %s61 = ssub.s32 96, 96
      %62 = vsyncadd [#allocation4], %s61
      %s64 = sshll.u32 [#allocation5], 4
      %s65 = int_to_ptr.vmem [resolvable:$true] %s64
      %67 = dma.vmem_to_hbm [thread:$0]  %s65, 96, %s1, [#allocation4]
    $region13: #{tpu_custom_call.1} parent=1 // pred_fallthru
      _
    // Predicated region
    $region14: #{tpu_custom_call.1} parent=1 // pred_check
      _
    $region15: #{tpu_custom_call.1} parent=1 // pred_check_branch
      %69 = sbr.rel (0) target = $region17
    $region16: #{tpu_custom_call.1} parent=1 // pred_region
      %70 = dma.done [#allocation4], 96
    $region17: #{tpu_custom_call.1} parent=1 // pred_fallthru
      _
    %71 = vsyncpa [#allocation3], 1
    %72 = vsyncpa [#allocation4], 1

</llo_original>
